<compile_context>
chip_gen: v6e
topology: v6e:2x2x1
jax: 0.10.0
libtpu: 0.0.40
codegen_flags: <defaults>
</compile_context>

<pallas_src>
import functools

import numpy as np
import jax
import jax.numpy as jnp
from jax.experimental import pallas as pl
from jax.experimental.pallas import tpu as pltpu


def _round_up(x, m):
    return (x + m - 1) // m * m


_ROW_TILE_BYTES = 2 << 20   # per-array, per-buffer budget for gt/pred row tiles (f32)
_BIN_TILE_BYTES = 8 << 20   # combined cos+sin per-buffer budget for a bin tile (bf16)


@functools.lru_cache(maxsize=None)
def _rdft_basis_np(l, kc_pad):
    """Real-DFT cos/sin bases, shape (L, kc_pad) f32 numpy, symmetry weights folded in.

    Padded bin columns (>= L//2 + 1) are exactly zero, so they contribute 0 to the
    magnitude sum.  Returned as numpy so lru_cache never pins device buffers.
    """
    kbins = l // 2 + 1
    n = np.arange(l, dtype=np.int64)
    k = np.arange(kbins, dtype=np.int64)
    nk = (n[:, None] * k[None, :]) % l                    # int64: no overflow pre-mod
    ang = (2.0 * np.pi / l) * nk.astype(np.float64)
    w = np.full((kbins,), 2.0, dtype=np.float64)          # interior bins counted twice
    w[0] = 1.0                                            # DC once
    if l % 2 == 0:
        w[l // 2] = 1.0                                   # Nyquist once
    cosb = np.zeros((l, kc_pad), dtype=np.float32)
    sinb = np.zeros((l, kc_pad), dtype=np.float32)
    cosb[:, :kbins] = np.cos(ang) * w
    sinb[:, :kbins] = np.sin(ang) * w
    return cosb, sinb


def _pick_tiles(m, l):
    """Row tile (tm, padded rows) and bin tile (tk, padded bin count)."""
    # Row tile: amortize per-step overhead for small L; keep v7x VMEM headroom for big L.
    tm_cap = (_ROW_TILE_BYTES // (4 * l)) // 8 * 8
    tm_cap = max(8, min(tm_cap, 1024 if l <= 256 else 256))
    tm = min(_round_up(m, 8), tm_cap)
    m_pad = _round_up(m, tm)
    # Bin tile: lane-dense, bounded so the (cos+sin) bf16 block fits the budget.
    kbins = l // 2 + 1
    kc = _round_up(kbins, 128)
    tk_cap = max(128, (_BIN_TILE_BYTES // (4 * l)) // 128 * 128)   # 2 bases * 2 B/elem
    if kc <= tk_cap:
        tk = kc
    else:
        tk = tk_cap
        kc = _round_up(kc, tk)
    return tm, m_pad, tk, kc


def gloss_kernel(gt_ref, pred_ref, cos_ref, sin_ref, out_ref, *, lbd, beta):
    j = pl.program_id(1)                 # bin-tile axis (arbitrary / accumulating)

    @pl.when(j == 0)
    def _():
        out_ref[...] = jnp.zeros_like(out_ref)

    diff = gt_ref[...].astype(jnp.float32) - pred_ref[...].astype(jnp.float32)

    # FFT term for this bin block: bf16 MXU operands, f32 accumulation.
    diff_bf = diff.astype(jnp.bfloat16)
    re = jnp.dot(diff_bf, cos_ref[...], preferred_element_type=jnp.float32)
    im = jnp.dot(diff_bf, sin_ref[...], preferred_element_type=jnp.float32)
    fft_sum = jnp.sum(jnp.sqrt(re * re + im * im))   # symmetry weights folded in basis
    partial = beta * fft_sum

    # Time-domain L1 term (f32): counted once per row tile (first bin block only).
    l1 = jnp.sum(jnp.abs(diff))
    partial = partial + jnp.where(j == 0, lbd * l1, jnp.float32(0.0))

    # Per-row-tile partial accumulates across the bin axis; lane-dense VMEM tile
    # (no per-step scalar/SMEM read-modify-write, safe under a parallel row axis).
    out_ref[...] += partial


def gloss(rppg_gt, rppg_pred, proba_pred, lbd=0.1, beta=0.2):
    """rppg_gt, rppg_pred: (B, C, L); proba_pred: (B,) -> scalar loss (float32)."""
    b, c, l = rppg_gt.shape
    m = b * c

    # (B, C, L) -> (B*C, L) in the wrapper (free layout plumbing).
    gt2 = rppg_gt.reshape(m, l).astype(jnp.float32)
    pred2 = rppg_pred.reshape(m, l).astype(jnp.float32)

    tm, m_pad, tk, kc = _pick_tiles(m, l)
    if m_pad != m:                        # zero rows contribute 0 to both loss terms
        gt2 = jnp.pad(gt2, ((0, m_pad - m), (0, 0)))
        pred2 = jnp.pad(pred2, ((0, m_pad - m), (0, 0)))
    grid_m = m_pad // tm
    grid_k = kc // tk

    cos_np, sin_np = _rdft_basis_np(l, kc)
    cosb = jnp.asarray(cos_np, dtype=jnp.bfloat16)
    sinb = jnp.asarray(sin_np, dtype=jnp.bfloat16)

    # Raise the scoped VMEM limit only when the pipelined working set needs it.
    need = (2 * (2 * tm * l * 4)          # gt + pred, double-buffered f32
            + 2 * (2 * l * tk * 2)        # cos + sin, double-buffered bf16
            + 4 * tm * tk * 4             # re / im / mag intermediates (approx)
            + 2 * 8 * 128 * 4)            # per-tile output block
    cp_kwargs = dict(dimension_semantics=("parallel", "arbitrary"))
    if need > (12 << 20):
        cp_kwargs["vmem_limit_bytes"] = min(int(need * 1.5) + (4 << 20), 64 << 20)

    partials = pl.pallas_call(
        functools.partial(gloss_kernel, lbd=float(lbd), beta=float(beta)),
        out_shape=jax.ShapeDtypeStruct((grid_m, 8, 128), jnp.float32),
        grid=(grid_m, grid_k),
        in_specs=[
            pl.BlockSpec((tm, l), lambda i, j: (i, 0)),   # gt rows   (pipelined)
            pl.BlockSpec((tm, l), lambda i, j: (i, 0)),   # pred rows (pipelined)
            pl.BlockSpec((l, tk), lambda i, j: (0, j)),   # cos basis (bin-tiled, bf16)
            pl.BlockSpec((l, tk), lambda i, j: (0, j)),   # sin basis (bin-tiled, bf16)
        ],
        out_specs=pl.BlockSpec((1, 8, 128), lambda i, j: (i, 0, 0)),  # per-tile partial
        compiler_params=pltpu.CompilerParams(**cp_kwargs),
    )(gt2, pred2, cosb, sinb)

    # Tiny wrapper-side reductions: sum of per-tile partials + scalar proba term.
    fft_l1 = jnp.sum(partials[:, 0, 0])
    proba_term = 0.5 * jnp.sum((proba_pred.astype(jnp.float32) - 1.0) ** 2)
    return fft_l1 + proba_term


if __name__ == "__main__":
    key = jax.random.PRNGKey(0)
    k1, k2, k3 = jax.random.split(key, 3)

    B, C, L = 2, 4, 16
    rppg_gt = jax.random.normal(k1, (B, C, L), dtype=jnp.float32)
    rppg_pred = jax.random.normal(k2, (B, C, L), dtype=jnp.float32)
    proba_pred = jax.random.uniform(k3, (B,), dtype=jnp.float32)

    loss = gloss(rppg_gt, rppg_pred, proba_pred)
    loss = jax.block_until_ready(loss)

    # Plain-JAX reference of the same math (f32 FFT).  The kernel runs the DFT matmul
    # with bf16 MXU operands (per the perf review), so compare at a bf16-appropriate
    # tolerance.
    diff = rppg_gt - rppg_pred
    ref = (
        0.5 * jnp.sum((proba_pred - 1.0) ** 2)
        + 0.1 * jnp.sum(jnp.abs(diff))
        + 0.2 * jnp.sum(jnp.abs(jnp.fft.fft(rppg_gt, axis=-1)
                                - jnp.fft.fft(rppg_pred, axis=-1)))
    )
    assert jnp.allclose(loss, ref, rtol=1e-2, atol=1e-2), (loss, ref)

    print("KERNEL_OK")
</pallas_src>

<mosaic_0001>
module attributes {stable_mosaic.version = 11 : i64} {
  func.func @gloss_kernel(%arg0: i32, %arg1: i32, %arg2: memref<8x16xf32, #tpu.memory_space<vmem>>, %arg3: memref<8x16xf32, #tpu.memory_space<vmem>>, %arg4: memref<16x128xbf16, #tpu.memory_space<vmem>>, %arg5: memref<16x128xbf16, #tpu.memory_space<vmem>>, %arg6: memref<1x8x128xf32, #tpu.memory_space<vmem>>) attributes {dimension_semantics = [#tpu.dimension_semantics<parallel>, #tpu.dimension_semantics<arbitrary>], iteration_bounds = array<i64: 1, 1>, scalar_prefetch = 0 : i64, scratch_operands = 0 : i64, tpu.core_type = #tpu.core_type<tc>, window_params = [{transform_indices = @transform_0, window_bounds = array<i64: 8, 16>}, {transform_indices = @transform_1, window_bounds = array<i64: 8, 16>}, {transform_indices = @transform_2, window_bounds = array<i64: 16, 128>}, {transform_indices = @transform_3, window_bounds = array<i64: 16, 128>}, {transform_indices = @transform_4, window_bounds = array<i64: 1, 8, 128>}]} {
    %c0_i32 = arith.constant 0 : i32
    %0 = arith.cmpi eq, %arg1, %c0_i32 : i32
    %1 = arith.extui %0 : i1 to i32
    %c0_i32_0 = arith.constant 0 : i32
    %2 = arith.cmpi ne, %1, %c0_i32_0 : i32
    scf.if %2 {
      %cst_21 = arith.constant 0.000000e+00 : f32
      %33 = vector.broadcast %cst_21 : f32 to vector<1x8x128xf32>
      %c0_22 = arith.constant 0 : index
      %c0_23 = arith.constant 0 : index
      %c0_24 = arith.constant 0 : index
      %34 = vector.load %arg6[%c0_22, %c0_23, %c0_24] : memref<1x8x128xf32, #tpu.memory_space<vmem>>, vector<1x8x128xf32>
      tpu.vector_store %arg6[%c0_22, %c0_23, %c0_24], %33 {strides = array<i32>} : memref<1x8x128xf32, #tpu.memory_space<vmem>>, vector<1x8x128xf32>,
    } else {
    }
    %c0 = arith.constant 0 : index
    %c0_1 = arith.constant 0 : index
    %3 = vector.load %arg2[%c0, %c0_1] : memref<8x16xf32, #tpu.memory_space<vmem>>, vector<8x16xf32>
    %c0_2 = arith.constant 0 : index
    %c0_3 = arith.constant 0 : index
    %4 = vector.load %arg3[%c0_2, %c0_3] : memref<8x16xf32, #tpu.memory_space<vmem>>, vector<8x16xf32>
    %5 = arith.subf %3, %4 : vector<8x16xf32>
    %6 = arith.truncf %5 : vector<8x16xf32> to vector<8x16xbf16>
    %c0_4 = arith.constant 0 : index
    %c0_5 = arith.constant 0 : index
    %7 = vector.load %arg4[%c0_4, %c0_5] : memref<16x128xbf16, #tpu.memory_space<vmem>>, vector<16x128xbf16>
    %cst = arith.constant dense<0.000000e+00> : vector<8x128xf32>
    %8 = tpu.matmul %6, %7, %cst {dimension_numbers = #tpu.dot_dimension_numbers<[1], [0], [0], [1], [0, 0, 1, 1], [], []>} : vector<8x16xbf16>, vector<16x128xbf16>, vector<8x128xf32> -> vector<8x128xf32>
    %c0_6 = arith.constant 0 : index
    %c0_7 = arith.constant 0 : index
    %9 = vector.load %arg5[%c0_6, %c0_7] : memref<16x128xbf16, #tpu.memory_space<vmem>>, vector<16x128xbf16>
    %cst_8 = arith.constant dense<0.000000e+00> : vector<8x128xf32>
    %10 = tpu.matmul %6, %9, %cst_8 {dimension_numbers = #tpu.dot_dimension_numbers<[1], [0], [0], [1], [0, 0, 1, 1], [], []>} : vector<8x16xbf16>, vector<16x128xbf16>, vector<8x128xf32> -> vector<8x128xf32>
    %11 = arith.mulf %8, %8 : vector<8x128xf32>
    %12 = arith.mulf %10, %10 : vector<8x128xf32>
    %13 = arith.addf %11, %12 : vector<8x128xf32>
    %14 = math.sqrt %13 : vector<8x128xf32>
    %15 = vector.shape_cast %14 : vector<8x128xf32> to vector<1x8x128xf32>
    %cst_9 = arith.constant dense<0.000000e+00> : vector<1xf32>
    %16 = vector.multi_reduction <add>, %15, %cst_9 [1, 2] : vector<1x8x128xf32> to vector<1xf32>
    %17 = vector.shape_cast %16 : vector<1xf32> to vector<1x1x1xf32>
    %18 = vector.extract %17[0, 0, 0] : f32 from vector<1x1x1xf32>
    %cst_10 = arith.constant 2.000000e-01 : f32
    %19 = arith.mulf %cst_10, %18 : f32
    %20 = math.absf %5 : vector<8x16xf32>
    %21 = vector.shape_cast %20 : vector<8x16xf32> to vector<1x8x16xf32>
    %cst_11 = arith.constant dense<0.000000e+00> : vector<1xf32>
    %22 = vector.multi_reduction <add>, %21, %cst_11 [1, 2] : vector<1x8x16xf32> to vector<1xf32>
    %23 = vector.shape_cast %22 : vector<1xf32> to vector<1x1x1xf32>
    %24 = vector.extract %23[0, 0, 0] : f32 from vector<1x1x1xf32>
    %c0_i32_12 = arith.constant 0 : i32
    %25 = arith.cmpi eq, %arg1, %c0_i32_12 : i32
    %cst_13 = arith.constant 1.000000e-01 : f32
    %26 = arith.mulf %cst_13, %24 : f32
    %cst_14 = arith.constant 0.000000e+00 : f32
    %27 = arith.select %25, %26, %cst_14 : f32
    %28 = arith.addf %19, %27 : f32
    %c0_15 = arith.constant 0 : index
    %c0_16 = arith.constant 0 : index
    %c0_17 = arith.constant 0 : index
    %29 = vector.load %arg6[%c0_15, %c0_16, %c0_17] : memref<1x8x128xf32, #tpu.memory_space<vmem>>, vector<1x8x128xf32>
    %30 = vector.broadcast %28 : f32 to vector<1x8x128xf32>
    %31 = arith.addf %29, %30 : vector<1x8x128xf32>
    %c0_18 = arith.constant 0 : index
    %c0_19 = arith.constant 0 : index
    %c0_20 = arith.constant 0 : index
    %32 = vector.load %arg6[%c0_18, %c0_19, %c0_20] : memref<1x8x128xf32, #tpu.memory_space<vmem>>, vector<1x8x128xf32>
    tpu.vector_store %arg6[%c0_18, %c0_19, %c0_20], %31 {strides = array<i32>} : memref<1x8x128xf32, #tpu.memory_space<vmem>>, vector<1x8x128xf32>,
    return
  }
  func.func @transform_0(%arg0: i32, %arg1: i32) -> (i32, i32) {
    %c0_i32 = arith.constant 0 : i32
    %c0_i32_0 = arith.constant 0 : i32
    return %arg0, %c0_i32 : i32, i32
  }
  func.func @transform_1(%arg0: i32, %arg1: i32) -> (i32, i32) {
    %c0_i32 = arith.constant 0 : i32
    %c0_i32_0 = arith.constant 0 : i32
    return %arg0, %c0_i32 : i32, i32
  }
  func.func @transform_2(%arg0: i32, %arg1: i32) -> (i32, i32) {
    %c0_i32 = arith.constant 0 : i32
    %c0_i32_0 = arith.constant 0 : i32
    return %c0_i32, %arg1 : i32, i32
  }
  func.func @transform_3(%arg0: i32, %arg1: i32) -> (i32, i32) {
    %c0_i32 = arith.constant 0 : i32
    %c0_i32_0 = arith.constant 0 : i32
    return %c0_i32, %arg1 : i32, i32
  }
  func.func @transform_4(%arg0: i32, %arg1: i32) -> (i32, i32, i32) {
    %c0_i32 = arith.constant 0 : i32
    %c0_i32_0 = arith.constant 0 : i32
    %c0_i32_1 = arith.constant 0 : i32
    return %arg0, %c0_i32, %c0_i32_0 : i32, i32, i32
  }
}

</mosaic_0001>

<llo_original>
// kernel: tpu_custom_call.1
$region0: #{tpu_custom_call.1}
  #allocation0 [shape = 'u32[]', space=smem, size = 0x4, offset = 0x4, fixed_abs, tag = 'smem constant byte address 0x4 - core index']
  #allocation1 [shape = 'u32[144,128]{1,0:T(1,128)}', space=vmem, size = 0x12000, scoped, tag = 'internal scratch']
  %s0 = inlined_call_operand.hbm [shape: f32[8,16], index: 0, kind: input, shape index: {}]
  %s1 = inlined_call_operand.hbm [shape: f32[8,16], index: 1, kind: input, shape index: {}]
  %s2 = inlined_call_operand.hbm [shape: bf16[16,128], index: 2, kind: input, shape index: {}]
  %s3 = inlined_call_operand.hbm [shape: bf16[16,128], index: 3, kind: input, shape index: {}]
  %s4 = inlined_call_operand.hbm [shape: f32[1,8,128], index: 4, kind: output, shape index: {}]
  %s5 = sld [smem:[#allocation0]]
  $region46: #{tpu_custom_call.1} parent=0
    _
  %s7 = ssub.s32 1, %s5
  %s8 = scalar_select 0, %s7, %s5
  $region1: #{tpu_custom_call.1} parent=0
    #allocation2 [shape = 'u8[4096]{0}', space=vmem, size = 0x1000, scoped, tag = 'input window, operand 0, single buffered']
    #allocation3 [shape = 's32[1]{0}', space=sflag, size = 0x4, scoped, tag = 'scoped memory for tpu_custom_call.1']
    #allocation4 [shape = 's32[1]{0}', space=sflag, size = 0x4, scoped, tag = 'scoped memory for tpu_custom_call.1']
    #allocation5 [shape = 'u8[4096]{0}', space=vmem, size = 0x1000, scoped, tag = 'input window, operand 1, single buffered']
    #allocation6 [shape = 's32[1]{0}', space=sflag, size = 0x4, scoped, tag = 'scoped memory for tpu_custom_call.1']
    #allocation7 [shape = 'u8[4096]{0}', space=vmem, size = 0x1000, scoped, tag = 'input window, operand 2, single buffered']
    #allocation8 [shape = 'u8[4096]{0}', space=vmem, size = 0x1000, scoped, tag = 'input window, operand 3, single buffered']
    #allocation9 [shape = 's32[1]{0}', space=sflag, size = 0x4, scoped, tag = 'scoped memory for tpu_custom_call.1']
    #allocation10 [shape = 'u8[4096]{0}', space=vmem, size = 0x1000, scoped, tag = 'output window, operand 0, single buffered']
    %9 = vsyncpa [#allocation3], 0
    %10 = vsyncpa [#allocation6], 0
    %11 = vsyncpa [#allocation9], 0
    %12 = vsyncpa [#allocation4], 0
    // Predicated region
    $region2: #{tpu_custom_call.1} parent=1 // pred_check
      _
    $region3: #{tpu_custom_call.1} parent=1 // pred_check_branch
      %14 = sbr.rel (0) target = $region5
    $region4: #{tpu_custom_call.1} parent=1 // pred_region
      %s16 = ssub.s32 128, 128
      %17 = vsyncadd [#allocation3], %s16
      %s19 = sshll.u32 [#allocation2], 4
      %s20 = int_to_ptr.vmem [resolvable:$true] %s19
      %22 = dma.hbm_to_vmem [thread:$0]  %s0, 128, %s20, [#allocation3]
    $region5: #{tpu_custom_call.1} parent=1 // pred_fallthru
      _
    // Predicated region
    $region6: #{tpu_custom_call.1} parent=1 // pred_check
      _
    $region7: #{tpu_custom_call.1} parent=1 // pred_check_branch
      %24 = sbr.rel (0) target = $region9
    $region8: #{tpu_custom_call.1} parent=1 // pred_region
      %s26 = ssub.s32 128, 128
      %27 = vsyncadd [#allocation6], %s26
      %s29 = sshll.u32 [#allocation5], 4
      %s30 = int_to_ptr.vmem [resolvable:$true] %s29
      %32 = dma.hbm_to_vmem [thread:$0]  %s1, 128, %s30, [#allocation6]
    $region9: #{tpu_custom_call.1} parent=1 // pred_fallthru
      _
    // Predicated region
    $region10: #{tpu_custom_call.1} parent=1 // pred_check
      _
    $region11: #{tpu_custom_call.1} parent=1 // pred_check_branch
      %34 = sbr.rel (0) target = $region13
    $region12: #{tpu_custom_call.1} parent=1 // pred_region
      %s36 = ssub.s32 128, 128
      %37 = vsyncadd [#allocation6], %s36
      %s38 = sshll.u32 [#allocation7], 4
      %s39 = int_to_ptr.vmem [resolvable:$true] %s38
      %44 = dma.hbm_to_vmem [thread:$0]  %s2, 128, %s39, [#allocation6], 64, 64, 4
    $region13: #{tpu_custom_call.1} parent=1 // pred_fallthru
      _
    // Predicated region
    $region14: #{tpu_custom_call.1} parent=1 // pred_check
      _
    $region15: #{tpu_custom_call.1} parent=1 // pred_check_branch
      %46 = sbr.rel (0) target = $region17
    $region16: #{tpu_custom_call.1} parent=1 // pred_region
      %s48 = ssub.s32 128, 128
      %49 = vsyncadd [#allocation9], %s48
      %s50 = sshll.u32 [#allocation8], 4
      %s51 = int_to_ptr.vmem [resolvable:$true] %s50
      %56 = dma.hbm_to_vmem [thread:$0]  %s3, 128, %s51, [#allocation9], 64, 64, 4
    $region17: #{tpu_custom_call.1} parent=1 // pred_fallthru
      _
    // Predicated region
    $region18: #{tpu_custom_call.1} parent=1 // pred_check
      _
    $region19: #{tpu_custom_call.1} parent=1 // pred_check_branch
      %58 = sbr.rel (0) target = $region21
    $region20: #{tpu_custom_call.1} parent=1 // pred_region
      %59 = dma.done [#allocation3], 128
    $region21: #{tpu_custom_call.1} parent=1 // pred_fallthru
      _
    // Predicated region
    $region22: #{tpu_custom_call.1} parent=1 // pred_check
      _
    $region23: #{tpu_custom_call.1} parent=1 // pred_check_branch
      %61 = sbr.rel (0) target = $region25
    $region24: #{tpu_custom_call.1} parent=1 // pred_region
      %62 = dma.done [#allocation6], 128
    $region25: #{tpu_custom_call.1} parent=1 // pred_fallthru
      _
    // Predicated region
    $region26: #{tpu_custom_call.1} parent=1 // pred_check
      _
    $region27: #{tpu_custom_call.1} parent=1 // pred_check_branch
      %64 = sbr.rel (0) target = $region29
    $region28: #{tpu_custom_call.1} parent=1 // pred_region
      %65 = dma.done [#allocation6], 128
    $region29: #{tpu_custom_call.1} parent=1 // pred_fallthru
      _
    // Predicated region
    $region30: #{tpu_custom_call.1} parent=1 // pred_check
      _
    $region31: #{tpu_custom_call.1} parent=1 // pred_check_branch
      %67 = sbr.rel (0) target = $region33
    $region32: #{tpu_custom_call.1} parent=1 // pred_region
      %68 = dma.done [#allocation9], 128
    $region33: #{tpu_custom_call.1} parent=1 // pred_fallthru
      _
    %p70 = scmp.eq.s32.totalorder 0, 0
    // Predicated region
    $region34: #{tpu_custom_call.1} parent=1 // pred_check
      %p71 = pneg %p70
    $region35: #{tpu_custom_call.1} parent=1 // pred_check_branch
      %73 = sbr.rel (%p71) target = $region37
    $region36: #{tpu_custom_call.1} parent=1 // pred_region
      %74 = vst [vmem:[#allocation10] sm:$0xff] 0.0
    $region37: #{tpu_custom_call.1} parent=1 // pred_fallthru
      _
    %v75 = vld [vmem:[#allocation2] sm:$0xff]
    %v76 = vld [vmem:[#allocation5] sm:$0xff]
    %v77 = vsub.f32 %v75, %v76
    %v78 = vpack.c.bf16 %v77, %v77
    %v79 = vld [vmem:[#allocation7] sm:$0xf]
    %v80 = vld [vmem:[#allocation7 + $0x4] sm:$0xf]
    %v83 = vunpack.c.l.b16 %v79
    %v84 = vunpack.c.l.b16 %v80
    %v85 = vpack.c.b16 %v84, %v83
    %vm87 = vcmask 130048
    %v89 = vsel %vm87, %v78, 0
    %91 = vmatprep.subr.bf16.mxu0 0
    %92 = vmatpush1.bf16.msra.mxu0 0
    %93 = vmatprep.subr.bf16.mxu0 0
    %94 = vmatpush1.bf16.msra.mxu0 0
    %95 = vmatprep.subr.bf16.mxu0 0
    %96 = vmatpush1.bf16.msra.mxu0 0
    %97 = vmatprep.subr.bf16.mxu0 0
    %98 = vmatpush1.bf16.msra.mxu0 0
    %99 = vmatprep.subr.bf16.mxu0 0
    %100 = vmatpush1.bf16.msra.mxu0 0
    %101 = vmatprep.subr.bf16.mxu0 0
    %102 = vmatpush1.bf16.msra.mxu0 0
    %103 = vmatprep.subr.bf16.mxu0 0
    %104 = vmatpush1.bf16.msra.mxu0 0
    %105 = vmatprep.subr.bf16.mxu0 0
    %106 = vmatpush1.bf16.msra.mxu0 %v85
    %107 = vmatprep.subr.bf16.mxu0 0
    %108 = vmatpush2.bf16.msra.mxu0 0
    %109 = vmatprep.subr.bf16.mxu0 0
    %110 = vmatpush2.bf16.msra.mxu0 0
    %111 = vmatprep.subr.bf16.mxu0 0
    %112 = vmatpush2.bf16.msra.mxu0 0
    %113 = vmatprep.subr.bf16.mxu0 0
    %114 = vmatpush2.bf16.msra.mxu0 0
    %115 = vmatprep.subr.bf16.mxu0 0
    %116 = vmatpush2.bf16.msra.mxu0 0
    %117 = vmatprep.subr.bf16.mxu0 0
    %118 = vmatpush2.bf16.msra.mxu0 0
    %119 = vmatprep.subr.bf16.mxu0 0
    %120 = vmatpush2.bf16.msra.mxu0 0
    %121 = vmatprep.subr.bf16.mxu0 0
    %122 = vmatpush2.bf16.msra.mxu0 0
    %123 = vmatprep.mubr.bf16.mxu0 0
    %124 = vmatmul.mubr.bf16.gmra.mxu0 %v89
    %v125 = vpop.f32.mrf.mxu0
    %v126 = vadd.f32 0.0, %v125
    %v127 = vpop.f32.mrf.mxu0
    %v128 = vpop.f32.mrf.mxu0
    %v129 = vpop.f32.mrf.mxu0
    %130 = vdwg.mxu0
    %v131 = vld [vmem:[#allocation8] sm:$0xf]
    %v132 = vld [vmem:[#allocation8 + $0x4] sm:$0xf]
    %v135 = vunpack.c.l.b16 %v131
    %v136 = vunpack.c.l.b16 %v132
    %v137 = vpack.c.b16 %v136, %v135
    %139 = vmatprep.subr.bf16.mxu0 0
    %140 = vmatpush1.bf16.msra.mxu0 0
    %141 = vmatprep.subr.bf16.mxu0 0
    %142 = vmatpush1.bf16.msra.mxu0 0
    %143 = vmatprep.subr.bf16.mxu0 0
    %144 = vmatpush1.bf16.msra.mxu0 0
    %145 = vmatprep.subr.bf16.mxu0 0
    %146 = vmatpush1.bf16.msra.mxu0 0
    %147 = vmatprep.subr.bf16.mxu0 0
    %148 = vmatpush1.bf16.msra.mxu0 0
    %149 = vmatprep.subr.bf16.mxu0 0
    %150 = vmatpush1.bf16.msra.mxu0 0
    %151 = vmatprep.subr.bf16.mxu0 0
    %152 = vmatpush1.bf16.msra.mxu0 0
    %153 = vmatprep.subr.bf16.mxu0 0
    %154 = vmatpush1.bf16.msra.mxu0 %v137
    %155 = vmatprep.subr.bf16.mxu0 0
    %156 = vmatpush2.bf16.msra.mxu0 0
    %157 = vmatprep.subr.bf16.mxu0 0
    %158 = vmatpush2.bf16.msra.mxu0 0
    %159 = vmatprep.subr.bf16.mxu0 0
    %160 = vmatpush2.bf16.msra.mxu0 0
    %161 = vmatprep.subr.bf16.mxu0 0
    %162 = vmatpush2.bf16.msra.mxu0 0
    %163 = vmatprep.subr.bf16.mxu0 0
    %164 = vmatpush2.bf16.msra.mxu0 0
    %165 = vmatprep.subr.bf16.mxu0 0
    %166 = vmatpush2.bf16.msra.mxu0 0
    %167 = vmatprep.subr.bf16.mxu0 0
    %168 = vmatpush2.bf16.msra.mxu0 0
    %169 = vmatprep.subr.bf16.mxu0 0
    %170 = vmatpush2.bf16.msra.mxu0 0
    %171 = vmatprep.mubr.bf16.mxu0 0
    %172 = vmatmul.mubr.bf16.gmra.mxu0 %v89
    %v173 = vpop.f32.mrf.mxu0
    %v174 = vadd.f32 0.0, %v173
    %v175 = vpop.f32.mrf.mxu0
    %v176 = vpop.f32.mrf.mxu0
    %v177 = vpop.f32.mrf.mxu0
    %178 = vdwg.mxu0
    %v179 = vmul.f32 %v126, %v126
    %v180 = vmul.f32 %v174, %v174
    %v181 = vadd.f32 %v179, %v180
    %v182 = vrsqrt.pop %v181
    %v183 = vmul.f32 %v181, %v182
    %vm184 = vcmp.eq.f32.partialorder %v181, inf
    %v185 = vsel %vm184, %v181, %v183
    %vm186 = vcmp.eq.f32.partialorder %v181, 0.0
    %v187 = vand.u32 %v181, 2147483648
    %v188 = vsel %vm186, %v187, %v185
    %189 = vadd.xlane.f32.xlu0 %v188
    %v190 = vpop.xlane.xlu0 %189
    %v191 = vrot.slane %v190, 4
    %v192 = vadd.f32 %v190, %v191
    %v193 = vrot.slane %v192, 2
    %v194 = vadd.f32 %v192, %v193
    %v195 = vrot.slane %v194, 1
    %v196 = vadd.f32 %v194, %v195
    %s197 = vtos %v196
    %s198 = smul.f32 %s197, 0.2
    %v199 = vand.u32 2147483647, %v77
    %v200 = vsel %vm87, %v199, 0.0
    %201 = vadd.xlane.f32.xlu0 %v200
    %v202 = vpop.xlane.xlu0 %201
    %v203 = vrot.slane %v202, 4
    %v204 = vadd.f32 %v202, %v203
    %v205 = vrot.slane %v204, 2
    %v206 = vadd.f32 %v204, %v205
    %v207 = vrot.slane %v206, 1
    %v208 = vadd.f32 %v206, %v207
    %s209 = vtos %v208
    %s210 = smul.f32 %s209, 0.1
    %s211 = scalar_select %p70, %s210, 0.0
    %s212 = sadd.f32 %s198, %s211
    %v213 = vld [vmem:[#allocation10] sm:$0xff]
    %v214 = vstv %s212
    %v215 = vadd.f32 %v213, %v214
    %216 = vst [vmem:[#allocation10] sm:$0xff] %v215
    // Predicated region
    $region38: #{tpu_custom_call.1} parent=1 // pred_check
      _
    $region39: #{tpu_custom_call.1} parent=1 // pred_check_branch
      %218 = sbr.rel (0) target = $region41
    $region40: #{tpu_custom_call.1} parent=1 // pred_region
      %s220 = ssub.s32 128, 128
      %221 = vsyncadd [#allocation4], %s220
      %s223 = sshll.u32 [#allocation10], 4
      %s224 = int_to_ptr.vmem [resolvable:$true] %s223
      %226 = dma.vmem_to_hbm [thread:$0]  %s224, 128, %s4, [#allocation4]
    $region41: #{tpu_custom_call.1} parent=1 // pred_fallthru
      _
    // Predicated region
    $region42: #{tpu_custom_call.1} parent=1 // pred_check
      _
    $region43: #{tpu_custom_call.1} parent=1 // pred_check_branch
      %228 = sbr.rel (0) target = $region45
    $region44: #{tpu_custom_call.1} parent=1 // pred_region
      %229 = dma.done [#allocation4], 128
    $region45: #{tpu_custom_call.1} parent=1 // pred_fallthru
      _
    %230 = vsyncpa [#allocation3], 1
    %231 = vsyncpa [#allocation6], 1
    %232 = vsyncpa [#allocation9], 1
    %233 = vsyncpa [#allocation4], 1

</llo_original>
